<compile_context>
chip_gen: v5e
topology: v5e:2x2
jax: 0.10.0
libtpu: 0.0.40
codegen_flags: <defaults>
</compile_context>

<pallas_src>
import functools

import jax
import jax.numpy as jnp
from jax.experimental import pallas as pl
from jax.experimental.pallas import tpu as pltpu

MARGIN = 1.5
EPS = 1e-12  # F.normalize default eps (EPS^2 = 1e-24 is still a normal f32)


def _contrastive_loss_kernel(a_ref, b_ref, c_ref, out_ref, *,
                             batch, tile_rows, margin):
    a = a_ref[...].astype(jnp.float32)
    b = b_ref[...].astype(jnp.float32)
    c = c_ref[...].astype(jnp.float32)

    def rowdot(x, y):
        return jnp.sum(x * y, axis=1, keepdims=True)          # (TB, 1)

    def inv_norm(x):
        # 1 / max(||x||, EPS) as a single EUP rsqrt.
        return jax.lax.rsqrt(jnp.maximum(rowdot(x, x), EPS * EPS))

    inv_a = inv_norm(a)
    inv_b = inv_norm(b)
    inv_c = inv_norm(c)

    def pair_loss(x, inv_x, y, inv_y):
        # For unit-norm rows: ||xn - yn||^2 = 2 - 2 * <x,y> * inv_x * inv_y
        d2 = 2.0 - 2.0 * rowdot(x, y) * inv_x * inv_y
        d = jnp.sqrt(jnp.maximum(d2, 0.0))                     # clamp f32 rounding
        return jnp.logaddexp(0.0, margin - d)                  # stable softplus

    loss = pair_loss(a, inv_a, b, inv_b)
    loss = loss + pair_loss(a, inv_a, c, inv_c)
    loss = loss + pair_loss(b, inv_b, c, inv_c)                # (TB, 1)

    rem = batch % tile_rows                                    # static Python int
    if rem == 0:
        # Every tile is full: no masking anywhere.
        out_ref[...] = jnp.sum(loss, keepdims=True)            # (1, 1)
    else:
        i = pl.program_id(0)
        last = pl.num_programs(0) - 1

        @pl.when(i != last)
        def _():
            out_ref[...] = jnp.sum(loss, keepdims=True)

        @pl.when(i == last)
        def _():
            # Only the (single) partial tile pays for the iota/compare/select.
            row_ids = jax.lax.broadcasted_iota(jnp.int32, (tile_rows, 1), 0)
            masked = jnp.where(row_ids < rem, loss, 0.0)
            out_ref[...] = jnp.sum(masked, keepdims=True)


def _pick_tile_rows(batch, dim):
    """Returns (tile_rows, vmem_limit_bytes) sized for the detected generation.

    bytes_per_row counts the lane-padded width: 3 inputs x 2 (double-buffered)
    plus ~3 live f32 working copies. Budget/limit are generation-aware:
    v5e/v6e (128 MiB VMEM) get a larger budget; v7x (64 MiB) a smaller one.
    """
    padded_d = max(128, ((dim + 127) // 128) * 128)

    try:
        vmem_cap = pltpu.get_tpu_info().vmem_capacity_bytes
    except Exception:
        vmem_cap = 64 * 1024 * 1024  # conservative fallback (v7x-sized)

    if vmem_cap >= 100 * 1024 * 1024:        # v5e / v6e: 128 MiB physical
        budget = 28 * 1024 * 1024
        vmem_limit = 64 * 1024 * 1024
    else:                                    # v7x: 64 MiB physical per TC
        budget = 20 * 1024 * 1024
        vmem_limit = 36 * 1024 * 1024

    bytes_per_row = (2 * 3 + 3) * padded_d * 4
    tb = budget // bytes_per_row
    tb = int(min(tb, batch, 4096))

    # Guarantee >= 2 grid tiles for batches that can afford it, so the
    # "parallel" grid axis can shard across both v7x TensorCores.
    if batch >= 16:
        split_cap = (((batch + 1) // 2 + 7) // 8) * 8    # ceil(B/2) -> mult of 8
        tb = min(tb, split_cap)

    if batch >= 8:
        tb = max(8, (tb // 8) * 8)           # (8,128) sublane constraint
    else:
        tb = batch                            # block == full array dim -> allowed
    return tb, vmem_limit


def contrastive_loss(features_a, features_b, features_c, margin=MARGIN):
    B, D = features_a.shape
    assert features_b.shape == (B, D) and features_c.shape == (B, D)

    tb, vmem_limit = _pick_tile_rows(B, D)
    num_tiles = pl.cdiv(B, tb)

    in_spec = pl.BlockSpec((tb, D), lambda i: (i, 0))
    kernel = functools.partial(_contrastive_loss_kernel,
                               batch=B, tile_rows=tb, margin=margin)

    partial_sums = pl.pallas_call(
        kernel,
        out_shape=jax.ShapeDtypeStruct((num_tiles, 1), jnp.float32),
        grid=(num_tiles,),
        in_specs=[in_spec, in_spec, in_spec],
        out_specs=pl.BlockSpec((1, 1), lambda i: (i, 0)),
        compiler_params=pltpu.CompilerParams(
            # Per-tile partial sums -> no serial reduction; "parallel" lets
            # v7x shard tiles across both TensorCores.
            dimension_semantics=("parallel",),
            vmem_limit_bytes=vmem_limit,
        ),
    )(features_a, features_b, features_c)

    return jnp.sum(partial_sums) / B


def _reference(features_a, features_b, features_c, margin=MARGIN):
    def norm(x):
        n = jnp.sqrt(jnp.sum(x * x, axis=1, keepdims=True))
        return x / jnp.maximum(n, EPS)

    a, b, c = norm(features_a), norm(features_b), norm(features_c)
    d_ab = jnp.sqrt(jnp.sum((a - b) ** 2, axis=1))
    d_ac = jnp.sqrt(jnp.sum((a - c) ** 2, axis=1))
    d_bc = jnp.sqrt(jnp.sum((b - c) ** 2, axis=1))
    sp = lambda z: jnp.logaddexp(0.0, z)
    return jnp.mean(sp(margin - d_ab) + sp(margin - d_ac) + sp(margin - d_bc))


if __name__ == "__main__":
    key = jax.random.PRNGKey(0)
    k1, k2, k3, k4, k5, k6 = jax.random.split(key, 6)

    # Small shape consistent with the module: (batch, feature_dim).
    B, D = 8, 32
    feat_a = jax.random.normal(k1, (B, D), dtype=jnp.float32)
    feat_b = jax.random.normal(k2, (B, D), dtype=jnp.float32)
    feat_c = jax.random.normal(k3, (B, D), dtype=jnp.float32)

    loss = contrastive_loss(feat_a, feat_b, feat_c)
    jax.block_until_ready(loss)
    ref = _reference(feat_a, feat_b, feat_c)
    assert jnp.allclose(loss, ref, rtol=1e-5, atol=1e-5), (loss, ref)

    # Also exercise the multi-tile + partial-last-tile masking path.
    B2, D2 = 20, 32
    fa = jax.random.normal(k4, (B2, D2), dtype=jnp.float32)
    fb = jax.random.normal(k5, (B2, D2), dtype=jnp.float32)
    fc = jax.random.normal(k6, (B2, D2), dtype=jnp.float32)

    loss2 = contrastive_loss(fa, fb, fc)
    jax.block_until_ready(loss2)
    ref2 = _reference(fa, fb, fc)
    assert jnp.allclose(loss2, ref2, rtol=1e-5, atol=1e-5), (loss2, ref2)

    print("KERNEL_OK")
</pallas_src>

<mosaic_0001>
module attributes {stable_mosaic.version = 11 : i64} {
  func.func @_contrastive_loss_kernel(%arg0: i32, %arg1: memref<8x32xf32, #tpu.memory_space<vmem>>, %arg2: memref<8x32xf32, #tpu.memory_space<vmem>>, %arg3: memref<8x32xf32, #tpu.memory_space<vmem>>, %arg4: memref<1x1xf32, #tpu.memory_space<vmem>>) attributes {dimension_semantics = [#tpu.dimension_semantics<parallel>], iteration_bounds = array<i64: 1>, scalar_prefetch = 0 : i64, scratch_operands = 0 : i64, tpu.core_type = #tpu.core_type<tc>, window_params = [{transform_indices = @transform_0, window_bounds = array<i64: 8, 32>}, {transform_indices = @transform_1, window_bounds = array<i64: 8, 32>}, {transform_indices = @transform_2, window_bounds = array<i64: 8, 32>}, {transform_indices = @transform_3, window_bounds = array<i64: 1, 1>}]} {
    %c0 = arith.constant 0 : index
    %c0_0 = arith.constant 0 : index
    %0 = vector.load %arg1[%c0, %c0_0] : memref<8x32xf32, #tpu.memory_space<vmem>>, vector<8x32xf32>
    %c0_1 = arith.constant 0 : index
    %c0_2 = arith.constant 0 : index
    %1 = vector.load %arg2[%c0_1, %c0_2] : memref<8x32xf32, #tpu.memory_space<vmem>>, vector<8x32xf32>
    %c0_3 = arith.constant 0 : index
    %c0_4 = arith.constant 0 : index
    %2 = vector.load %arg3[%c0_3, %c0_4] : memref<8x32xf32, #tpu.memory_space<vmem>>, vector<8x32xf32>
    %3 = arith.mulf %0, %0 : vector<8x32xf32>
    %cst = arith.constant dense<0.000000e+00> : vector<8xf32>
    %4 = vector.multi_reduction <add>, %3, %cst [1] : vector<8x32xf32> to vector<8xf32>
    %5 = vector.shape_cast %4 : vector<8xf32> to vector<8x1xf32>
    %cst_5 = arith.constant 1.000000e-24 : f32
    %6 = vector.broadcast %cst_5 : f32 to vector<8x1xf32>
    %7 = arith.maximumf %5, %6 : vector<8x1xf32>
    %8 = math.rsqrt %7 : vector<8x1xf32>
    %9 = arith.mulf %1, %1 : vector<8x32xf32>
    %cst_6 = arith.constant dense<0.000000e+00> : vector<8xf32>
    %10 = vector.multi_reduction <add>, %9, %cst_6 [1] : vector<8x32xf32> to vector<8xf32>
    %11 = vector.shape_cast %10 : vector<8xf32> to vector<8x1xf32>
    %cst_7 = arith.constant 1.000000e-24 : f32
    %12 = vector.broadcast %cst_7 : f32 to vector<8x1xf32>
    %13 = arith.maximumf %11, %12 : vector<8x1xf32>
    %14 = math.rsqrt %13 : vector<8x1xf32>
    %15 = arith.mulf %2, %2 : vector<8x32xf32>
    %cst_8 = arith.constant dense<0.000000e+00> : vector<8xf32>
    %16 = vector.multi_reduction <add>, %15, %cst_8 [1] : vector<8x32xf32> to vector<8xf32>
    %17 = vector.shape_cast %16 : vector<8xf32> to vector<8x1xf32>
    %cst_9 = arith.constant 1.000000e-24 : f32
    %18 = vector.broadcast %cst_9 : f32 to vector<8x1xf32>
    %19 = arith.maximumf %17, %18 : vector<8x1xf32>
    %20 = math.rsqrt %19 : vector<8x1xf32>
    %21 = arith.mulf %0, %1 : vector<8x32xf32>
    %cst_10 = arith.constant dense<0.000000e+00> : vector<8xf32>
    %22 = vector.multi_reduction <add>, %21, %cst_10 [1] : vector<8x32xf32> to vector<8xf32>
    %23 = vector.shape_cast %22 : vector<8xf32> to vector<8x1xf32>
    %cst_11 = arith.constant 2.000000e+00 : f32
    %24 = vector.broadcast %cst_11 : f32 to vector<8x1xf32>
    %25 = arith.mulf %24, %23 : vector<8x1xf32>
    %26 = arith.mulf %25, %8 : vector<8x1xf32>
    %27 = arith.mulf %26, %14 : vector<8x1xf32>
    %cst_12 = arith.constant 2.000000e+00 : f32
    %28 = vector.broadcast %cst_12 : f32 to vector<8x1xf32>
    %29 = arith.subf %28, %27 : vector<8x1xf32>
    %cst_13 = arith.constant 0.000000e+00 : f32
    %30 = vector.broadcast %cst_13 : f32 to vector<8x1xf32>
    %31 = arith.maximumf %29, %30 : vector<8x1xf32>
    %32 = math.sqrt %31 : vector<8x1xf32>
    %cst_14 = arith.constant 1.500000e+00 : f32
    %33 = vector.broadcast %cst_14 : f32 to vector<8x1xf32>
    %34 = arith.subf %33, %32 : vector<8x1xf32>
    %cst_15 = arith.constant 0.000000e+00 : f32
    %35 = vector.broadcast %cst_15 : f32 to vector<8x1xf32>
    %36 = arith.maximumf %35, %34 : vector<8x1xf32>
    %37 = vector.broadcast %cst_15 : f32 to vector<8x1xf32>
    %38 = arith.subf %37, %34 : vector<8x1xf32>
    %39 = arith.cmpf one, %38, %38 : vector<8x1xf32>
    %40 = vector.broadcast %cst_15 : f32 to vector<8x1xf32>
    %41 = arith.addf %40, %34 : vector<8x1xf32>
    %42 = math.absf %38 : vector<8x1xf32>
    %cst_16 = arith.constant 0.000000e+00 : f32
    %43 = vector.broadcast %cst_16 : f32 to vector<8x1xf32>
    %44 = arith.subf %43, %42 : vector<8x1xf32>
    %45 = math.exp %44 : vector<8x1xf32>
    %46 = math.log1p %45 : vector<8x1xf32>
    %47 = arith.addf %36, %46 : vector<8x1xf32>
    %48 = arith.select %39, %41, %47 : vector<8x1xi1>, vector<8x1xf32>
    %49 = arith.mulf %0, %2 : vector<8x32xf32>
    %cst_17 = arith.constant dense<0.000000e+00> : vector<8xf32>
    %50 = vector.multi_reduction <add>, %49, %cst_17 [1] : vector<8x32xf32> to vector<8xf32>
    %51 = vector.shape_cast %50 : vector<8xf32> to vector<8x1xf32>
    %cst_18 = arith.constant 2.000000e+00 : f32
    %52 = vector.broadcast %cst_18 : f32 to vector<8x1xf32>
    %53 = arith.mulf %52, %51 : vector<8x1xf32>
    %54 = arith.mulf %53, %8 : vector<8x1xf32>
    %55 = arith.mulf %54, %20 : vector<8x1xf32>
    %cst_19 = arith.constant 2.000000e+00 : f32
    %56 = vector.broadcast %cst_19 : f32 to vector<8x1xf32>
    %57 = arith.subf %56, %55 : vector<8x1xf32>
    %cst_20 = arith.constant 0.000000e+00 : f32
    %58 = vector.broadcast %cst_20 : f32 to vector<8x1xf32>
    %59 = arith.maximumf %57, %58 : vector<8x1xf32>
    %60 = math.sqrt %59 : vector<8x1xf32>
    %cst_21 = arith.constant 1.500000e+00 : f32
    %61 = vector.broadcast %cst_21 : f32 to vector<8x1xf32>
    %62 = arith.subf %61, %60 : vector<8x1xf32>
    %cst_22 = arith.constant 0.000000e+00 : f32
    %63 = vector.broadcast %cst_22 : f32 to vector<8x1xf32>
    %64 = arith.maximumf %63, %62 : vector<8x1xf32>
    %65 = vector.broadcast %cst_22 : f32 to vector<8x1xf32>
    %66 = arith.subf %65, %62 : vector<8x1xf32>
    %67 = arith.cmpf one, %66, %66 : vector<8x1xf32>
    %68 = vector.broadcast %cst_22 : f32 to vector<8x1xf32>
    %69 = arith.addf %68, %62 : vector<8x1xf32>
    %70 = math.absf %66 : vector<8x1xf32>
    %cst_23 = arith.constant 0.000000e+00 : f32
    %71 = vector.broadcast %cst_23 : f32 to vector<8x1xf32>
    %72 = arith.subf %71, %70 : vector<8x1xf32>
    %73 = math.exp %72 : vector<8x1xf32>
    %74 = math.log1p %73 : vector<8x1xf32>
    %75 = arith.addf %64, %74 : vector<8x1xf32>
    %76 = arith.select %67, %69, %75 : vector<8x1xi1>, vector<8x1xf32>
    %77 = arith.addf %48, %76 : vector<8x1xf32>
    %78 = arith.mulf %1, %2 : vector<8x32xf32>
    %cst_24 = arith.constant dense<0.000000e+00> : vector<8xf32>
    %79 = vector.multi_reduction <add>, %78, %cst_24 [1] : vector<8x32xf32> to vector<8xf32>
    %80 = vector.shape_cast %79 : vector<8xf32> to vector<8x1xf32>
    %cst_25 = arith.constant 2.000000e+00 : f32
    %81 = vector.broadcast %cst_25 : f32 to vector<8x1xf32>
    %82 = arith.mulf %81, %80 : vector<8x1xf32>
    %83 = arith.mulf %82, %14 : vector<8x1xf32>
    %84 = arith.mulf %83, %20 : vector<8x1xf32>
    %cst_26 = arith.constant 2.000000e+00 : f32
    %85 = vector.broadcast %cst_26 : f32 to vector<8x1xf32>
    %86 = arith.subf %85, %84 : vector<8x1xf32>
    %cst_27 = arith.constant 0.000000e+00 : f32
    %87 = vector.broadcast %cst_27 : f32 to vector<8x1xf32>
    %88 = arith.maximumf %86, %87 : vector<8x1xf32>
    %89 = math.sqrt %88 : vector<8x1xf32>
    %cst_28 = arith.constant 1.500000e+00 : f32
    %90 = vector.broadcast %cst_28 : f32 to vector<8x1xf32>
    %91 = arith.subf %90, %89 : vector<8x1xf32>
    %cst_29 = arith.constant 0.000000e+00 : f32
    %92 = vector.broadcast %cst_29 : f32 to vector<8x1xf32>
    %93 = arith.maximumf %92, %91 : vector<8x1xf32>
    %94 = vector.broadcast %cst_29 : f32 to vector<8x1xf32>
    %95 = arith.subf %94, %91 : vector<8x1xf32>
    %96 = arith.cmpf one, %95, %95 : vector<8x1xf32>
    %97 = vector.broadcast %cst_29 : f32 to vector<8x1xf32>
    %98 = arith.addf %97, %91 : vector<8x1xf32>
    %99 = math.absf %95 : vector<8x1xf32>
    %cst_30 = arith.constant 0.000000e+00 : f32
    %100 = vector.broadcast %cst_30 : f32 to vector<8x1xf32>
    %101 = arith.subf %100, %99 : vector<8x1xf32>
    %102 = math.exp %101 : vector<8x1xf32>
    %103 = math.log1p %102 : vector<8x1xf32>
    %104 = arith.addf %93, %103 : vector<8x1xf32>
    %105 = arith.select %96, %98, %104 : vector<8x1xi1>, vector<8x1xf32>
    %106 = arith.addf %77, %105 : vector<8x1xf32>
    %107 = vector.shape_cast %106 : vector<8x1xf32> to vector<1x8x1xf32>
    %cst_31 = arith.constant dense<0.000000e+00> : vector<1xf32>
    %108 = vector.multi_reduction <add>, %107, %cst_31 [1, 2] : vector<1x8x1xf32> to vector<1xf32>
    %109 = vector.shape_cast %108 : vector<1xf32> to vector<1x1x1xf32>
    %110 = vector.extract %109[0, 0, 0] : f32 from vector<1x1x1xf32>
    %111 = vector.broadcast %110 : f32 to vector<1x1xf32>
    %c0_32 = arith.constant 0 : index
    %c0_33 = arith.constant 0 : index
    %112 = vector.load %arg4[%c0_32, %c0_33] : memref<1x1xf32, #tpu.memory_space<vmem>>, vector<1x1xf32>
    tpu.vector_store %arg4[%c0_32, %c0_33], %111 {strides = array<i32>} : memref<1x1xf32, #tpu.memory_space<vmem>>, vector<1x1xf32>,
    return
  }
  func.func @transform_0(%arg0: i32) -> (i32, i32) {
    %c0_i32 = arith.constant 0 : i32
    %c0_i32_0 = arith.constant 0 : i32
    return %arg0, %c0_i32 : i32, i32
  }
  func.func @transform_1(%arg0: i32) -> (i32, i32) {
    %c0_i32 = arith.constant 0 : i32
    %c0_i32_0 = arith.constant 0 : i32
    return %arg0, %c0_i32 : i32, i32
  }
  func.func @transform_2(%arg0: i32) -> (i32, i32) {
    %c0_i32 = arith.constant 0 : i32
    %c0_i32_0 = arith.constant 0 : i32
    return %arg0, %c0_i32 : i32, i32
  }
  func.func @transform_3(%arg0: i32) -> (i32, i32) {
    %c0_i32 = arith.constant 0 : i32
    %c0_i32_0 = arith.constant 0 : i32
    return %arg0, %c0_i32 : i32, i32
  }
}

</mosaic_0001>

<llo_original>
// kernel: tpu_custom_call.1
$region0: #{tpu_custom_call.1}
  #allocation0 [shape = 'u32[]', space=smem, size = 0x4, offset = 0x4, fixed_abs, tag = 'smem constant byte address 0x4 - core index']
  #allocation1 [shape = 'u32[72,128]{1,0:T(1,128)}', space=vmem, size = 0x9000, scoped, tag = 'internal scratch']
  %s0 = inlined_call_operand.hbm [shape: f32[8,32], index: 0, kind: input, shape index: {}]
  %s1 = inlined_call_operand.hbm [shape: f32[8,32], index: 1, kind: input, shape index: {}]
  %s2 = inlined_call_operand.hbm [shape: f32[8,32], index: 2, kind: input, shape index: {}]
  %s3 = inlined_call_operand.hbm [shape: f32[1,1], index: 3, kind: output, shape index: {}]
  %s4 = sld [smem:[#allocation0]]
  $region34: #{tpu_custom_call.1} parent=0
    _
  %s6 = ssub.s32 1, %s4
  %s7 = scalar_select 0, %s6, %s4
  $region1: #{tpu_custom_call.1} parent=0
    #allocation2 [shape = 'u8[4096]{0}', space=vmem, size = 0x1000, scoped, tag = 'input window, operand 0, single buffered']
    #allocation3 [shape = 's32[1]{0}', space=sflag, size = 0x4, scoped, tag = 'scoped memory for tpu_custom_call.1']
    #allocation4 [shape = 's32[1]{0}', space=sflag, size = 0x4, scoped, tag = 'scoped memory for tpu_custom_call.1']
    #allocation5 [shape = 'u8[4096]{0}', space=vmem, size = 0x1000, scoped, tag = 'input window, operand 1, single buffered']
    #allocation6 [shape = 's32[1]{0}', space=sflag, size = 0x4, scoped, tag = 'scoped memory for tpu_custom_call.1']
    #allocation7 [shape = 'u8[4096]{0}', space=vmem, size = 0x1000, scoped, tag = 'input window, operand 2, single buffered']
    #allocation8 [shape = 'u8[512]{0}', space=vmem, size = 0x400, scoped, tag = 'output window, operand 0, single buffered']
    %8 = vsyncpa [#allocation3], 0
    %9 = vsyncpa [#allocation6], 0
    %10 = vsyncpa [#allocation4], 0
    // Predicated region
    $region2: #{tpu_custom_call.1} parent=1 // pred_check
      _
    $region3: #{tpu_custom_call.1} parent=1 // pred_check_branch
      %12 = sbr.rel (0) target = $region5
    $region4: #{tpu_custom_call.1} parent=1 // pred_region
      %14 = vsyncadd [#allocation3], 0
      %s16 = sshll.u32 %s0, 4
      %s17 = int_to_ptr.hbm [resolvable:$true] %s16
      %s18 = sshll.u32 [#allocation2], 4
      %s19 = int_to_ptr.vmem [resolvable:$true] %s18
      %21 = dma.hbm_to_vmem [thread:$0]  %s17, 128, %s19, [#allocation3]
    $region5: #{tpu_custom_call.1} parent=1 // pred_fallthru
      _
    // Predicated region
    $region6: #{tpu_custom_call.1} parent=1 // pred_check
      _
    $region7: #{tpu_custom_call.1} parent=1 // pred_check_branch
      %23 = sbr.rel (0) target = $region9
    $region8: #{tpu_custom_call.1} parent=1 // pred_region
      %25 = vsyncadd [#allocation6], 0
      %s27 = sshll.u32 %s1, 4
      %s28 = int_to_ptr.hbm [resolvable:$true] %s27
      %s29 = sshll.u32 [#allocation5], 4
      %s30 = int_to_ptr.vmem [resolvable:$true] %s29
      %32 = dma.hbm_to_vmem [thread:$0]  %s28, 128, %s30, [#allocation6]
    $region9: #{tpu_custom_call.1} parent=1 // pred_fallthru
      _
    // Predicated region
    $region10: #{tpu_custom_call.1} parent=1 // pred_check
      _
    $region11: #{tpu_custom_call.1} parent=1 // pred_check_branch
      %34 = sbr.rel (0) target = $region13
    $region12: #{tpu_custom_call.1} parent=1 // pred_region
      %36 = vsyncadd [#allocation6], 0
      %s38 = sshll.u32 %s2, 4
      %s39 = int_to_ptr.hbm [resolvable:$true] %s38
      %s40 = sshll.u32 [#allocation7], 4
      %s41 = int_to_ptr.vmem [resolvable:$true] %s40
      %43 = dma.hbm_to_vmem [thread:$0]  %s39, 128, %s41, [#allocation6]
    $region13: #{tpu_custom_call.1} parent=1 // pred_fallthru
      _
    // Predicated region
    $region14: #{tpu_custom_call.1} parent=1 // pred_check
      _
    $region15: #{tpu_custom_call.1} parent=1 // pred_check_branch
      %45 = sbr.rel (0) target = $region17
    $region16: #{tpu_custom_call.1} parent=1 // pred_region
      %47 = dma.done [#allocation3], 128
    $region17: #{tpu_custom_call.1} parent=1 // pred_fallthru
      _
    // Predicated region
    $region18: #{tpu_custom_call.1} parent=1 // pred_check
      _
    $region19: #{tpu_custom_call.1} parent=1 // pred_check_branch
      %49 = sbr.rel (0) target = $region21
    $region20: #{tpu_custom_call.1} parent=1 // pred_region
      %51 = dma.done [#allocation6], 128
    $region21: #{tpu_custom_call.1} parent=1 // pred_fallthru
      _
    // Predicated region
    $region22: #{tpu_custom_call.1} parent=1 // pred_check
      _
    $region23: #{tpu_custom_call.1} parent=1 // pred_check_branch
      %53 = sbr.rel (0) target = $region25
    $region24: #{tpu_custom_call.1} parent=1 // pred_region
      %55 = dma.done [#allocation6], 128
    $region25: #{tpu_custom_call.1} parent=1 // pred_fallthru
      _
    %v56 = vld [vmem:[#allocation2] sm:$0xff]
    %v57 = vld [vmem:[#allocation5] sm:$0xff]
    %v58 = vld [vmem:[#allocation7] sm:$0xff]
    %v59 = vmul.f32 %v56, %v56
    %vm60 = vcmask 261120
    %v61 = vsel %vm60, %v59, 0.0
    %62 = vadd.xlane.f32.xlu0 %v61
    %v63 = vpop.xlane.xlu0 %62
    %v64 = vmax.f32 %v63, 1e-24
    %v65 = vrsqrt.pop %v64
    %v66 = vmul.f32 %v65, %v64
    %v67 = vmul.f32 %v66, %v65
    %v68 = vmul.f32 0.5, %v67
    %v69 = vsub.f32 1.5, %v68
    %v70 = vmul.f32 %v65, %v69
    %vm71 = vweird.f32 %v64
    %vm72 = vweird.f32 %v65
    %vm73 = vmor %vm71, %vm72
    %v74 = vsel %vm73, %v65, %v70
    %v75 = vmul.f32 %v57, %v57
    %v76 = vsel %vm60, %v75, 0.0
    %77 = vadd.xlane.f32.xlu0 %v76
    %v78 = vpop.xlane.xlu0 %77
    %v79 = vmax.f32 %v78, 1e-24
    %v80 = vrsqrt.pop %v79
    %v81 = vmul.f32 %v80, %v79
    %v82 = vmul.f32 %v81, %v80
    %v83 = vmul.f32 0.5, %v82
    %v84 = vsub.f32 1.5, %v83
    %v85 = vmul.f32 %v80, %v84
    %vm86 = vweird.f32 %v79
    %vm87 = vweird.f32 %v80
    %vm88 = vmor %vm86, %vm87
    %v89 = vsel %vm88, %v80, %v85
    %v90 = vmul.f32 %v58, %v58
    %v91 = vsel %vm60, %v90, 0.0
    %92 = vadd.xlane.f32.xlu0 %v91
    %v93 = vpop.xlane.xlu0 %92
    %v94 = vmax.f32 %v93, 1e-24
    %v95 = vrsqrt.pop %v94
    %v96 = vmul.f32 %v95, %v94
    %v97 = vmul.f32 %v96, %v95
    %v98 = vmul.f32 0.5, %v97
    %v99 = vsub.f32 1.5, %v98
    %v100 = vmul.f32 %v95, %v99
    %vm101 = vweird.f32 %v94
    %vm102 = vweird.f32 %v95
    %vm103 = vmor %vm101, %vm102
    %v104 = vsel %vm103, %v95, %v100
    %v105 = vmul.f32 %v56, %v57
    %v106 = vsel %vm60, %v105, 0.0
    %107 = vadd.xlane.f32.xlu0 %v106
    %v108 = vpop.xlane.xlu0 %107
    %v109 = vmul.f32 %v108, 2.0
    %v110 = vmul.f32 %v109, %v74
    %v111 = vmul.f32 %v110, %v89
    %v112 = vsub.f32 2.0, %v111
    %v113 = vmax.f32 %v112, 0.0
    %v114 = vrsqrt.pop %v113
    %v115 = vmul.f32 %v114, %v113
    %v116 = vmul.f32 %v115, %v114
    %v117 = vmul.f32 0.5, %v116
    %v118 = vsub.f32 1.5, %v117
    %v119 = vmul.f32 %v114, %v118
    %v120 = vmul.f32 %v113, %v119
    %vm121 = vcmp.eq.f32.partialorder %v113, inf
    %v122 = vsel %vm121, %v113, %v120
    %vm123 = vcmp.eq.f32.partialorder %v113, 0.0
    %v124 = vand.u32 %v113, 2147483648
    %v125 = vsel %vm123, %v124, %v122
    %v126 = vsub.f32 1.5, %v125
    %v127 = vmax.f32 %v126, 0.0
    %v128 = vsub.f32 0.0, %v126
    %vm129 = vcmp.ne.f32.partialorder %v128, %v128
    %v130 = vadd.f32 %v126, 0.0
    %v131 = vand.u32 2147483647, %v128
    %v132 = vsub.f32 0.0, %v131
    %v133 = vmul.f32 %v132, 1.442695
    %v134 = vpow.pop %v133
    %v135 = vadd.f32 %v134, 1.0
    %v136 = vlog2.pop %v135
    %v137 = vmul.f32 %v136, 0.6931472
    %v138 = vmul.f32 -0.5, %v134
    %v139 = vadd.f32 %v138, 1.0
    %v140 = vmul.f32 %v139, %v134
    %v141 = vand.u32 2147483647, %v134
    %vm142 = vcmp.lt.f32.partialorder %v141, 0.0004427343
    %v143 = vsel %vm142, %v140, %v137
    %v144 = vadd.f32 %v127, %v143
    %v145 = vsel %vm129, %v130, %v144
    %v146 = vmul.f32 %v56, %v58
    %v147 = vsel %vm60, %v146, 0.0
    %148 = vadd.xlane.f32.xlu0 %v147
    %v149 = vpop.xlane.xlu0 %148
    %v150 = vmul.f32 %v149, 2.0
    %v151 = vmul.f32 %v150, %v74
    %v152 = vmul.f32 %v151, %v104
    %v153 = vsub.f32 2.0, %v152
    %v154 = vmax.f32 %v153, 0.0
    %v155 = vrsqrt.pop %v154
    %v156 = vmul.f32 %v155, %v154
    %v157 = vmul.f32 %v156, %v155
    %v158 = vmul.f32 0.5, %v157
    %v159 = vsub.f32 1.5, %v158
    %v160 = vmul.f32 %v155, %v159
    %v161 = vmul.f32 %v154, %v160
    %vm162 = vcmp.eq.f32.partialorder %v154, inf
    %v163 = vsel %vm162, %v154, %v161
    %vm164 = vcmp.eq.f32.partialorder %v154, 0.0
    %v165 = vand.u32 %v154, 2147483648
    %v166 = vsel %vm164, %v165, %v163
    %v167 = vsub.f32 1.5, %v166
    %v168 = vmax.f32 %v167, 0.0
    %v169 = vsub.f32 0.0, %v167
    %vm170 = vcmp.ne.f32.partialorder %v169, %v169
    %v171 = vadd.f32 %v167, 0.0
    %v172 = vand.u32 2147483647, %v169
    %v173 = vsub.f32 0.0, %v172
    %v174 = vmul.f32 %v173, 1.442695
    %v175 = vpow.pop %v174
    %v176 = vadd.f32 %v175, 1.0
    %v177 = vlog2.pop %v176
    %v178 = vmul.f32 %v177, 0.6931472
    %v179 = vmul.f32 -0.5, %v175
    %v180 = vadd.f32 %v179, 1.0
    %v181 = vmul.f32 %v180, %v175
    %v182 = vand.u32 2147483647, %v175
    %vm183 = vcmp.lt.f32.partialorder %v182, 0.0004427343
    %v184 = vsel %vm183, %v181, %v178
    %v185 = vadd.f32 %v168, %v184
    %v186 = vsel %vm170, %v171, %v185
    %v187 = vadd.f32 %v145, %v186
    %v188 = vmul.f32 %v57, %v58
    %v189 = vsel %vm60, %v188, 0.0
    %190 = vadd.xlane.f32.xlu0 %v189
    %v191 = vpop.xlane.xlu0 %190
    %v192 = vmul.f32 %v191, 2.0
    %v193 = vmul.f32 %v192, %v89
    %v194 = vmul.f32 %v193, %v104
    %v195 = vsub.f32 2.0, %v194
    %v196 = vmax.f32 %v195, 0.0
    %v197 = vrsqrt.pop %v196
    %v198 = vmul.f32 %v197, %v196
    %v199 = vmul.f32 %v198, %v197
    %v200 = vmul.f32 0.5, %v199
    %v201 = vsub.f32 1.5, %v200
    %v202 = vmul.f32 %v197, %v201
    %v203 = vmul.f32 %v196, %v202
    %vm204 = vcmp.eq.f32.partialorder %v196, inf
    %v205 = vsel %vm204, %v196, %v203
    %vm206 = vcmp.eq.f32.partialorder %v196, 0.0
    %v207 = vand.u32 %v196, 2147483648
    %v208 = vsel %vm206, %v207, %v205
    %v209 = vsub.f32 1.5, %v208
    %v210 = vmax.f32 %v209, 0.0
    %v211 = vsub.f32 0.0, %v209
    %vm212 = vcmp.ne.f32.partialorder %v211, %v211
    %v213 = vadd.f32 %v209, 0.0
    %v214 = vand.u32 2147483647, %v211
    %v215 = vsub.f32 0.0, %v214
    %v216 = vmul.f32 %v215, 1.442695
    %v217 = vpow.pop %v216
    %v218 = vadd.f32 %v217, 1.0
    %v219 = vlog2.pop %v218
    %v220 = vmul.f32 %v219, 0.6931472
    %v221 = vmul.f32 -0.5, %v217
    %v222 = vadd.f32 %v221, 1.0
    %v223 = vmul.f32 %v222, %v217
    %v224 = vand.u32 2147483647, %v217
    %vm225 = vcmp.lt.f32.partialorder %v224, 0.0004427343
    %v226 = vsel %vm225, %v223, %v220
    %v227 = vadd.f32 %v210, %v226
    %v228 = vsel %vm212, %v213, %v227
    %v229 = vadd.f32 %v187, %v228
    %vm230 = vcmask 7168
    %v231 = vsel %vm230, %v229, 0.0
    %232 = vadd.xlane.f32.xlu0 %v231
    %v233 = vpop.xlane.xlu0 %232
    %v234 = vrot.slane %v233, 4
    %v235 = vadd.f32 %v233, %v234
    %v236 = vrot.slane %v235, 2
    %v237 = vadd.f32 %v235, %v236
    %v238 = vrot.slane %v237, 1
    %v239 = vadd.f32 %v237, %v238
    %s240 = vtos %v239
    %v241 = vstv %s240
    %vm242 = vcmask 0
    %243 = vst.msk [vmem:[#allocation8] sm:$0x1] %vm242, %v241
    // Predicated region
    $region26: #{tpu_custom_call.1} parent=1 // pred_check
      _
    $region27: #{tpu_custom_call.1} parent=1 // pred_check_branch
      %245 = sbr.rel (0) target = $region29
    $region28: #{tpu_custom_call.1} parent=1 // pred_region
      %247 = vsyncadd [#allocation4], 0
      %s249 = sshll.u32 [#allocation8], 4
      %s250 = int_to_ptr.vmem [resolvable:$true] %s249
      %s251 = sshll.u32 %s3, 4
      %s252 = int_to_ptr.hbm [resolvable:$true] %s251
      %254 = dma.vmem_to_hbm [thread:$0]  %s250, 16, %s252, [#allocation4]
    $region29: #{tpu_custom_call.1} parent=1 // pred_fallthru
      _
    // Predicated region
    $region30: #{tpu_custom_call.1} parent=1 // pred_check
      _
    $region31: #{tpu_custom_call.1} parent=1 // pred_check_branch
      %256 = sbr.rel (0) target = $region33
    $region32: #{tpu_custom_call.1} parent=1 // pred_region
      %258 = dma.done [#allocation4], 16
    $region33: #{tpu_custom_call.1} parent=1 // pred_fallthru
      _
    %259 = vsyncpa [#allocation3], 1
    %260 = vsyncpa [#allocation6], 1
    %261 = vsyncpa [#allocation4], 1

</llo_original>
